<compile_context>
chip_gen: v7x
topology: tpu7x:2x2x1
jax: 0.10.0
libtpu: 0.0.40
codegen_flags: <defaults>
</compile_context>

<pallas_src>
import functools

import jax
import jax.numpy as jnp
from jax.experimental import pallas as pl
from jax.experimental.pallas import tpu as pltpu

LANE = 128


def _round_up(n, m):
    return ((n + m - 1) // m) * m


def _pick_block_batch(batch):
    """Largest batch tile that divides `batch`; keeps >=2 grid steps for big
    batches so the parallel batch axis can use both TensorCores on v7x."""
    candidates = (2048, 1024, 512, 256, 128)
    if batch >= 256:
        for tb in candidates:
            if batch % tb == 0 and batch // tb >= 2:
                return tb
    for tb in candidates:
        if batch % tb == 0:
            return tb
    return batch  # single (possibly sublane-sparse) tile for tiny batches


def _dqn_forward_kernel(state_ref, action_ref,
                        w1s_ref, w1a_ref, b1_ref,
                        w2_ref, b2_ref,
                        wo_ref, bo_ref,
                        out_ref, *, out_dim):
    """Fused forward: (dot_s + dot_a + b1, LeakyReLU) -> (Linear, LeakyReLU) -> Linear."""
    neg_slope = jnp.float32(0.01)        # nn.LeakyReLU default
    dot_dt = w1s_ref.dtype               # bf16 (pre-cast at init) or f32

    s = state_ref[...].astype(dot_dt)
    a = action_ref[...].astype(dot_dt)

    # Layer 1: split-W1 dots replace concat([state, action]) @ W1; single bias add.
    h1 = (jnp.dot(s, w1s_ref[...], preferred_element_type=jnp.float32)
          + jnp.dot(a, w1a_ref[...], preferred_element_type=jnp.float32)
          + b1_ref[...])
    h1 = jnp.maximum(h1, neg_slope * h1)  # LeakyReLU, f32 elementwise

    # Layer 2: Linear + LeakyReLU.
    h2 = jnp.dot(h1.astype(dot_dt), w2_ref[...],
                 preferred_element_type=jnp.float32) + b2_ref[...]
    h2 = jnp.maximum(h2, neg_slope * h2)

    # Output head: Linear (no activation). Store only the real out_dim columns
    # (padded lanes are exactly zero and are never written to HBM).
    q = jnp.dot(h2.astype(dot_dt), wo_ref[...],
                preferred_element_type=jnp.float32) + bo_ref[...]
    out_ref[...] = q[:, :out_dim].astype(out_ref.dtype)


def dqn_forward(state, action, kparams, out_dim, *, block_batch=None):
    """Pallas wrapper. state:[B,S], action:[B,A] -> q:[B, out_dim] (float32)."""
    batch, s_dim = state.shape
    a_dim = action.shape[1]
    h1 = kparams["w1s"].shape[1]
    h2 = kparams["w2"].shape[1]
    op = kparams["wo"].shape[1]
    assert out_dim <= op

    tb = block_batch if block_batch is not None else _pick_block_batch(batch)
    assert batch % tb == 0, (batch, tb)
    grid = (batch // tb,)

    kernel = functools.partial(_dqn_forward_kernel, out_dim=out_dim)

    def resident(shape):
        # Weight / bias block: same block index every step -> stays VMEM-resident.
        return pl.BlockSpec(shape, lambda i: (0, 0))

    return pl.pallas_call(
        kernel,
        out_shape=jax.ShapeDtypeStruct((batch, out_dim), jnp.float32),
        grid=grid,
        in_specs=[
            pl.BlockSpec((tb, s_dim), lambda i: (i, 0)),   # state tile
            pl.BlockSpec((tb, a_dim), lambda i: (i, 0)),   # action tile
            resident((s_dim, h1)),                         # w1_state
            resident((a_dim, h1)),                         # w1_action
            resident((1, h1)),                             # b1
            resident((h1, h2)),                            # w2
            resident((1, h2)),                             # b2
            resident((h2, op)),                            # wo
            resident((1, op)),                             # bo
        ],
        out_specs=pl.BlockSpec((tb, out_dim), lambda i: (i, 0)),
        compiler_params=pltpu.CompilerParams(
            dimension_semantics=("parallel",)),
    )(state, action,
      kparams["w1s"], kparams["w1a"], kparams["b1"],
      kparams["w2"], kparams["b2"],
      kparams["wo"], kparams["bo"])


def init_params(key, state_dim, action_dim, hidden_dims):
    """Deterministic PyTorch-Linear-style init (uniform +-1/sqrt(fan_in)), unpadded."""
    assert len(hidden_dims) == 2, "kernel is specialized to two hidden layers"
    dims_in = [state_dim + action_dim] + list(hidden_dims)
    dims_out = list(hidden_dims) + [action_dim]
    names = ["1", "2", "o"]

    params = {}
    for name, d_in, d_out in zip(names, dims_in, dims_out):
        key, kw, kb = jax.random.split(key, 3)
        bound = 1.0 / jnp.sqrt(jnp.float32(d_in))
        params[f"w{name}"] = jax.random.uniform(
            kw, (d_in, d_out), jnp.float32, -bound, bound)
        params[f"b{name}"] = jax.random.uniform(
            kb, (1, d_out), jnp.float32, -bound, bound)
    return params


def pad_params_for_kernel(params, state_dim, *, use_bf16=True):
    """Split W1 by input, zero-pad feature dims to multiples of 128 and (optionally)
    pre-cast the weights to bf16 — all once, at init. Biases stay f32."""
    w1, b1 = params["w1"], params["b1"]
    w2, b2 = params["w2"], params["b2"]
    wo, bo = params["wo"], params["bo"]

    h1 = _round_up(w1.shape[1], LANE)
    h2 = _round_up(w2.shape[1], LANE)
    op = _round_up(wo.shape[1], LANE)

    w1s, w1a = w1[:state_dim], w1[state_dim:]
    w_dt = jnp.bfloat16 if use_bf16 else jnp.float32

    def pad_w(x, rows, cols):
        return jnp.pad(x, ((0, rows - x.shape[0]), (0, cols - x.shape[1]))).astype(w_dt)

    def pad_b(x, cols):
        return jnp.pad(x, ((0, 0), (0, cols - x.shape[1])))  # f32, zero-padded lanes

    return {
        "w1s": pad_w(w1s, w1s.shape[0], h1),
        "w1a": pad_w(w1a, w1a.shape[0], h1),
        "b1": pad_b(b1, h1),
        "w2": pad_w(w2, h1, h2),
        "b2": pad_b(b2, h2),
        "wo": pad_w(wo, h2, op),
        "bo": pad_b(bo, op),
    }


def dqn_forward_ref(state, action, params):
    """Pure-JAX reference (unpadded, matches the PyTorch forward)."""
    x = jnp.concatenate([state, action], axis=-1)
    h = x @ params["w1"] + params["b1"]
    h = jnp.where(h > 0, h, 0.01 * h)
    h = h @ params["w2"] + params["b2"]
    h = jnp.where(h > 0, h, 0.01 * h)
    return h @ params["wo"] + params["bo"]


if __name__ == "__main__":
    config = dict(state_dim=12, action_dim=4, hidden_dims=[32, 32])

    key = jax.random.PRNGKey(0)
    k_params, k_state, k_action = jax.random.split(key, 3)

    params = init_params(k_params, config["state_dim"], config["action_dim"],
                         config["hidden_dims"])
    kparams_f32 = pad_params_for_kernel(params, config["state_dim"], use_bf16=False)
    kparams_bf16 = pad_params_for_kernel(params, config["state_dim"], use_bf16=True)

    # Small batch (single grid step), f32 path — tight tolerance vs reference.
    batch = 8
    state = jax.random.normal(k_state, (batch, config["state_dim"]), jnp.float32)
    action = jax.random.normal(k_action, (batch, config["action_dim"]), jnp.float32)

    q = jax.block_until_ready(
        dqn_forward(state, action, kparams_f32, config["action_dim"]))
    q_ref = dqn_forward_ref(state, action, params)
    assert q.shape == (batch, config["action_dim"]), q.shape
    assert jnp.allclose(q, q_ref, atol=1e-5, rtol=1e-5), "f32 mismatch vs reference"

    # Larger batch exercising the batch grid (2 steps of 128, parallel axis).
    batch2 = 256
    k_s2, k_a2 = jax.random.split(jax.random.PRNGKey(1))
    state2 = jax.random.normal(k_s2, (batch2, config["state_dim"]), jnp.float32)
    action2 = jax.random.normal(k_a2, (batch2, config["action_dim"]), jnp.float32)
    q2_ref = dqn_forward_ref(state2, action2, params)

    q2_f32 = jax.block_until_ready(
        dqn_forward(state2, action2, kparams_f32, config["action_dim"]))
    assert jnp.allclose(q2_f32, q2_ref, atol=1e-5, rtol=1e-5), "tiled f32 mismatch"

    # Default (bf16 MXU, f32 accumulation) path.
    q2_bf16 = jax.block_until_ready(
        dqn_forward(state2, action2, kparams_bf16, config["action_dim"]))
    assert jnp.allclose(q2_bf16, q2_ref, atol=5e-2, rtol=5e-2), "bf16 mismatch"

    print("KERNEL_OK")
</pallas_src>

<mosaic_0001>
module attributes {stable_mosaic.version = 11 : i64} {
  func.func @_dqn_forward_kernel(%arg0: i32, %arg1: memref<8x12xf32, #tpu.memory_space<vmem>>, %arg2: memref<8x4xf32, #tpu.memory_space<vmem>>, %arg3: memref<12x128xf32, #tpu.memory_space<vmem>>, %arg4: memref<4x128xf32, #tpu.memory_space<vmem>>, %arg5: memref<1x128xf32, #tpu.memory_space<vmem>>, %arg6: memref<128x128xf32, #tpu.memory_space<vmem>>, %arg7: memref<1x128xf32, #tpu.memory_space<vmem>>, %arg8: memref<128x128xf32, #tpu.memory_space<vmem>>, %arg9: memref<1x128xf32, #tpu.memory_space<vmem>>, %arg10: memref<8x4xf32, #tpu.memory_space<vmem>>) attributes {dimension_semantics = [#tpu.dimension_semantics<parallel>], iteration_bounds = array<i64: 1>, scalar_prefetch = 0 : i64, scratch_operands = 0 : i64, tpu.core_type = #tpu.core_type<tc>, window_params = [{transform_indices = @transform_0, window_bounds = array<i64: 8, 12>}, {transform_indices = @transform_1, window_bounds = array<i64: 8, 4>}, {pipeline_mode = #tpu.pipeline_mode<synchronous>, transform_indices = @transform_2, window_bounds = array<i64: 12, 128>}, {pipeline_mode = #tpu.pipeline_mode<synchronous>, transform_indices = @transform_3, window_bounds = array<i64: 4, 128>}, {pipeline_mode = #tpu.pipeline_mode<synchronous>, transform_indices = @transform_4, window_bounds = array<i64: 1, 128>}, {pipeline_mode = #tpu.pipeline_mode<synchronous>, transform_indices = @transform_5, window_bounds = array<i64: 128, 128>}, {pipeline_mode = #tpu.pipeline_mode<synchronous>, transform_indices = @transform_6, window_bounds = array<i64: 1, 128>}, {pipeline_mode = #tpu.pipeline_mode<synchronous>, transform_indices = @transform_7, window_bounds = array<i64: 128, 128>}, {pipeline_mode = #tpu.pipeline_mode<synchronous>, transform_indices = @transform_8, window_bounds = array<i64: 1, 128>}, {transform_indices = @transform_9, window_bounds = array<i64: 8, 4>}]} {
    %c0 = arith.constant 0 : index
    %c0_0 = arith.constant 0 : index
    %0 = vector.load %arg1[%c0, %c0_0] : memref<8x12xf32, #tpu.memory_space<vmem>>, vector<8x12xf32>
    %c0_1 = arith.constant 0 : index
    %c0_2 = arith.constant 0 : index
    %1 = vector.load %arg2[%c0_1, %c0_2] : memref<8x4xf32, #tpu.memory_space<vmem>>, vector<8x4xf32>
    %c0_3 = arith.constant 0 : index
    %c0_4 = arith.constant 0 : index
    %2 = vector.load %arg3[%c0_3, %c0_4] : memref<12x128xf32, #tpu.memory_space<vmem>>, vector<12x128xf32>
    %cst = arith.constant dense<0.000000e+00> : vector<8x128xf32>
    %3 = tpu.matmul %0, %2, %cst {dimension_numbers = #tpu.dot_dimension_numbers<[1], [0], [0], [1], [0, 0, 1, 1], [], []>} : vector<8x12xf32>, vector<12x128xf32>, vector<8x128xf32> -> vector<8x128xf32>
    %c0_5 = arith.constant 0 : index
    %c0_6 = arith.constant 0 : index
    %4 = vector.load %arg4[%c0_5, %c0_6] : memref<4x128xf32, #tpu.memory_space<vmem>>, vector<4x128xf32>
    %cst_7 = arith.constant dense<0.000000e+00> : vector<8x128xf32>
    %5 = tpu.matmul %1, %4, %cst_7 {dimension_numbers = #tpu.dot_dimension_numbers<[1], [0], [0], [1], [0, 0, 1, 1], [], []>} : vector<8x4xf32>, vector<4x128xf32>, vector<8x128xf32> -> vector<8x128xf32>
    %6 = arith.addf %3, %5 : vector<8x128xf32>
    %c0_8 = arith.constant 0 : index
    %c0_9 = arith.constant 0 : index
    %7 = vector.load %arg5[%c0_8, %c0_9] : memref<1x128xf32, #tpu.memory_space<vmem>>, vector<1x128xf32>
    %8 = vector.broadcast %7 : vector<1x128xf32> to vector<8x128xf32>
    %9 = arith.addf %6, %8 : vector<8x128xf32>
    %cst_10 = arith.constant 0.00999999977 : f32
    %10 = vector.broadcast %cst_10 : f32 to vector<8x128xf32>
    %11 = arith.mulf %10, %9 : vector<8x128xf32>
    %12 = arith.maximumf %9, %11 : vector<8x128xf32>
    %c0_11 = arith.constant 0 : index
    %c0_12 = arith.constant 0 : index
    %13 = vector.load %arg6[%c0_11, %c0_12] : memref<128x128xf32, #tpu.memory_space<vmem>>, vector<128x128xf32>
    %cst_13 = arith.constant dense<0.000000e+00> : vector<8x128xf32>
    %14 = tpu.matmul %12, %13, %cst_13 {dimension_numbers = #tpu.dot_dimension_numbers<[1], [0], [0], [1], [0, 0, 1, 1], [], []>} : vector<8x128xf32>, vector<128x128xf32>, vector<8x128xf32> -> vector<8x128xf32>
    %c0_14 = arith.constant 0 : index
    %c0_15 = arith.constant 0 : index
    %15 = vector.load %arg7[%c0_14, %c0_15] : memref<1x128xf32, #tpu.memory_space<vmem>>, vector<1x128xf32>
    %16 = vector.broadcast %15 : vector<1x128xf32> to vector<8x128xf32>
    %17 = arith.addf %14, %16 : vector<8x128xf32>
    %cst_16 = arith.constant 0.00999999977 : f32
    %18 = vector.broadcast %cst_16 : f32 to vector<8x128xf32>
    %19 = arith.mulf %18, %17 : vector<8x128xf32>
    %20 = arith.maximumf %17, %19 : vector<8x128xf32>
    %c0_17 = arith.constant 0 : index
    %c0_18 = arith.constant 0 : index
    %21 = vector.load %arg8[%c0_17, %c0_18] : memref<128x128xf32, #tpu.memory_space<vmem>>, vector<128x128xf32>
    %cst_19 = arith.constant dense<0.000000e+00> : vector<8x128xf32>
    %22 = tpu.matmul %20, %21, %cst_19 {dimension_numbers = #tpu.dot_dimension_numbers<[1], [0], [0], [1], [0, 0, 1, 1], [], []>} : vector<8x128xf32>, vector<128x128xf32>, vector<8x128xf32> -> vector<8x128xf32>
    %c0_20 = arith.constant 0 : index
    %c0_21 = arith.constant 0 : index
    %23 = vector.load %arg9[%c0_20, %c0_21] : memref<1x128xf32, #tpu.memory_space<vmem>>, vector<1x128xf32>
    %24 = vector.broadcast %23 : vector<1x128xf32> to vector<8x128xf32>
    %25 = arith.addf %22, %24 : vector<8x128xf32>
    %26 = vector.extract_strided_slice %25 {offsets = [0, 0], sizes = [8, 4], strides = [1, 1]} : vector<8x128xf32> to vector<8x4xf32>
    %c0_22 = arith.constant 0 : index
    %c0_23 = arith.constant 0 : index
    %27 = vector.load %arg10[%c0_22, %c0_23] : memref<8x4xf32, #tpu.memory_space<vmem>>, vector<8x4xf32>
    tpu.vector_store %arg10[%c0_22, %c0_23], %26 {strides = array<i32>} : memref<8x4xf32, #tpu.memory_space<vmem>>, vector<8x4xf32>,
    return
  }
  func.func @transform_0(%arg0: i32) -> (i32, i32) {
    %c0_i32 = arith.constant 0 : i32
    %c0_i32_0 = arith.constant 0 : i32
    return %arg0, %c0_i32 : i32, i32
  }
  func.func @transform_1(%arg0: i32) -> (i32, i32) {
    %c0_i32 = arith.constant 0 : i32
    %c0_i32_0 = arith.constant 0 : i32
    return %arg0, %c0_i32 : i32, i32
  }
  func.func @transform_2(%arg0: i32) -> (i32, i32) {
    %c0_i32 = arith.constant 0 : i32
    %c0_i32_0 = arith.constant 0 : i32
    %c0_i32_1 = arith.constant 0 : i32
    return %c0_i32, %c0_i32_0 : i32, i32
  }
  func.func @transform_3(%arg0: i32) -> (i32, i32) {
    %c0_i32 = arith.constant 0 : i32
    %c0_i32_0 = arith.constant 0 : i32
    %c0_i32_1 = arith.constant 0 : i32
    return %c0_i32, %c0_i32_0 : i32, i32
  }
  func.func @transform_4(%arg0: i32) -> (i32, i32) {
    %c0_i32 = arith.constant 0 : i32
    %c0_i32_0 = arith.constant 0 : i32
    %c0_i32_1 = arith.constant 0 : i32
    return %c0_i32, %c0_i32_0 : i32, i32
  }
  func.func @transform_5(%arg0: i32) -> (i32, i32) {
    %c0_i32 = arith.constant 0 : i32
    %c0_i32_0 = arith.constant 0 : i32
    %c0_i32_1 = arith.constant 0 : i32
    return %c0_i32, %c0_i32_0 : i32, i32
  }
  func.func @transform_6(%arg0: i32) -> (i32, i32) {
    %c0_i32 = arith.constant 0 : i32
    %c0_i32_0 = arith.constant 0 : i32
    %c0_i32_1 = arith.constant 0 : i32
    return %c0_i32, %c0_i32_0 : i32, i32
  }
  func.func @transform_7(%arg0: i32) -> (i32, i32) {
    %c0_i32 = arith.constant 0 : i32
    %c0_i32_0 = arith.constant 0 : i32
    %c0_i32_1 = arith.constant 0 : i32
    return %c0_i32, %c0_i32_0 : i32, i32
  }
  func.func @transform_8(%arg0: i32) -> (i32, i32) {
    %c0_i32 = arith.constant 0 : i32
    %c0_i32_0 = arith.constant 0 : i32
    %c0_i32_1 = arith.constant 0 : i32
    return %c0_i32, %c0_i32_0 : i32, i32
  }
  func.func @transform_9(%arg0: i32) -> (i32, i32) {
    %c0_i32 = arith.constant 0 : i32
    %c0_i32_0 = arith.constant 0 : i32
    return %arg0, %c0_i32 : i32, i32
  }
}

</mosaic_0001>

<llo_original>
// kernel: tpu_custom_call.1
$region0: #{tpu_custom_call.1}
  #allocation0 [shape = 'u32[]', space=smem, size = 0x4, offset = 0x4, fixed_abs, tag = 'smem constant byte address 0x4 - core index']
  #allocation1 [shape = 'u32[144,128]{1,0:T(1,128)}', space=vmem, size = 0x12000, scoped, tag = 'internal scratch']
  %s0 = inlined_call_operand.hbm [shape: f32[8,12], index: 0, kind: input, shape index: {}]
  %s1 = inlined_call_operand.vmem [shape: f32[8,4], index: 1, kind: input, shape index: {}]
  %s2 = inlined_call_operand.vmem [shape: f32[12,128], index: 2, kind: input, shape index: {}]
  %s3 = inlined_call_operand.vmem [shape: f32[4,128], index: 3, kind: input, shape index: {}]
  %s4 = inlined_call_operand.vmem [shape: f32[1,128], index: 4, kind: input, shape index: {}]
  %s5 = inlined_call_operand.hbm [shape: f32[128,128], index: 5, kind: input, shape index: {}]
  %s6 = inlined_call_operand.vmem [shape: f32[1,128], index: 6, kind: input, shape index: {}]
  %s7 = inlined_call_operand.hbm [shape: f32[128,128], index: 7, kind: input, shape index: {}]
  %s8 = inlined_call_operand.vmem [shape: f32[1,128], index: 8, kind: input, shape index: {}]
  %s9 = inlined_call_operand.vmem [shape: f32[8,4], index: 9, kind: output, shape index: {}]
  %s10 = sld [smem:[#allocation0]]
  $region58: #{tpu_custom_call.1} parent=0
    _
  %s12 = ssub.s32 1, %s10
  %s13 = scalar_select 0, %s12, %s10
  $region1: #{tpu_custom_call.1} parent=0
    #allocation2 [shape = 'u8[4096]{0}', space=vmem, size = 0x1000, scoped, tag = 'input window, operand 0, single buffered']
    #allocation3 [shape = 's32[1]{0}', space=sflag, size = 0x4, scoped, tag = 'scoped memory for tpu_custom_call.1']
    #allocation4 [shape = 'u8[65536]{0}', space=vmem, size = 0x10000, scoped, tag = 'input window, operand 5, single buffered']
    #allocation5 [shape = 's32[1]{0}', space=sflag, size = 0x4, scoped, tag = 'scoped memory for tpu_custom_call.1']
    #allocation6 [shape = 'u8[65536]{0}', space=vmem, size = 0x10000, scoped, tag = 'input window, operand 7, single buffered']
    %14 = vsyncpa [#allocation3], 0
    %15 = vsyncpa [#allocation5], 0
    // Predicated region
    $region2: #{tpu_custom_call.1} parent=1 // pred_check
      _
    $region3: #{tpu_custom_call.1} parent=1 // pred_check_branch
      %17 = sbr.rel (0) target = $region5
    $region4: #{tpu_custom_call.1} parent=1 // pred_region
      %s19 = ssub.s32 128, 128
      %20 = vsyncadd [#allocation3], %s19
      %s22 = sshll.u32 [#allocation2], 4
      %s23 = int_to_ptr.vmem [resolvable:$true] %s22
      %25 = dma.hbm_to_vmem [thread:$0]  %s0, 128, %s23, [#allocation3]
    $region5: #{tpu_custom_call.1} parent=1 // pred_fallthru
      _
    // Predicated region
    $region6: #{tpu_custom_call.1} parent=1 // pred_check
      _
    $region7: #{tpu_custom_call.1} parent=1 // pred_check_branch
      %27 = sbr.rel (0) target = $region9
    $region8: #{tpu_custom_call.1} parent=1 // pred_region
      _
    $region9: #{tpu_custom_call.1} parent=1 // pred_fallthru
      _
    // Predicated region
    $region10: #{tpu_custom_call.1} parent=1 // pred_check
      _
    $region11: #{tpu_custom_call.1} parent=1 // pred_check_branch
      %29 = sbr.rel (0) target = $region13
    $region12: #{tpu_custom_call.1} parent=1 // pred_region
      _
    $region13: #{tpu_custom_call.1} parent=1 // pred_fallthru
      _
    // Predicated region
    $region14: #{tpu_custom_call.1} parent=1 // pred_check
      _
    $region15: #{tpu_custom_call.1} parent=1 // pred_check_branch
      %31 = sbr.rel (0) target = $region17
    $region16: #{tpu_custom_call.1} parent=1 // pred_region
      _
    $region17: #{tpu_custom_call.1} parent=1 // pred_fallthru
      _
    // Predicated region
    $region18: #{tpu_custom_call.1} parent=1 // pred_check
      _
    $region19: #{tpu_custom_call.1} parent=1 // pred_check_branch
      %33 = sbr.rel (0) target = $region21
    $region20: #{tpu_custom_call.1} parent=1 // pred_region
      _
    $region21: #{tpu_custom_call.1} parent=1 // pred_fallthru
      _
    // Predicated region
    $region22: #{tpu_custom_call.1} parent=1 // pred_check
      _
    $region23: #{tpu_custom_call.1} parent=1 // pred_check_branch
      %35 = sbr.rel (0) target = $region25
    $region24: #{tpu_custom_call.1} parent=1 // pred_region
      %s37 = ssub.s32 2048, 2048
      %38 = vsyncadd [#allocation5], %s37
      %s39 = sshll.u32 [#allocation4], 4
      %s40 = int_to_ptr.vmem [resolvable:$true] %s39
      %45 = dma.hbm_to_vmem [thread:$0]  %s5, 2048, %s40, [#allocation5], 128, 128, 8
    $region25: #{tpu_custom_call.1} parent=1 // pred_fallthru
      _
    // Predicated region
    $region26: #{tpu_custom_call.1} parent=1 // pred_check
      _
    $region27: #{tpu_custom_call.1} parent=1 // pred_check_branch
      %47 = sbr.rel (0) target = $region29
    $region28: #{tpu_custom_call.1} parent=1 // pred_region
      _
    $region29: #{tpu_custom_call.1} parent=1 // pred_fallthru
      _
    // Predicated region
    $region30: #{tpu_custom_call.1} parent=1 // pred_check
      _
    $region31: #{tpu_custom_call.1} parent=1 // pred_check_branch
      %49 = sbr.rel (0) target = $region33
    $region32: #{tpu_custom_call.1} parent=1 // pred_region
      %s51 = ssub.s32 2048, 2048
      %52 = vsyncadd [#allocation5], %s51
      %s53 = sshll.u32 [#allocation6], 4
      %s54 = int_to_ptr.vmem [resolvable:$true] %s53
      %59 = dma.hbm_to_vmem [thread:$0]  %s7, 2048, %s54, [#allocation5], 128, 128, 8
    $region33: #{tpu_custom_call.1} parent=1 // pred_fallthru
      _
    // Predicated region
    $region34: #{tpu_custom_call.1} parent=1 // pred_check
      _
    $region35: #{tpu_custom_call.1} parent=1 // pred_check_branch
      %61 = sbr.rel (0) target = $region37
    $region36: #{tpu_custom_call.1} parent=1 // pred_region
      _
    $region37: #{tpu_custom_call.1} parent=1 // pred_fallthru
      _
    // Predicated region
    $region38: #{tpu_custom_call.1} parent=1 // pred_check
      _
    $region39: #{tpu_custom_call.1} parent=1 // pred_check_branch
      %63 = sbr.rel (0) target = $region41
    $region40: #{tpu_custom_call.1} parent=1 // pred_region
      %64 = dma.done [#allocation3], 128
    $region41: #{tpu_custom_call.1} parent=1 // pred_fallthru
      _
    // Predicated region
    $region42: #{tpu_custom_call.1} parent=1 // pred_check
      _
    $region43: #{tpu_custom_call.1} parent=1 // pred_check_branch
      %66 = sbr.rel (0) target = $region45
    $region44: #{tpu_custom_call.1} parent=1 // pred_region
      %67 = dma.done [#allocation5], 2048
    $region45: #{tpu_custom_call.1} parent=1 // pred_fallthru
      _
    // Predicated region
    $region46: #{tpu_custom_call.1} parent=1 // pred_check
      _
    $region47: #{tpu_custom_call.1} parent=1 // pred_check_branch
      %69 = sbr.rel (0) target = $region49
    $region48: #{tpu_custom_call.1} parent=1 // pred_region
      %70 = dma.done [#allocation5], 2048
    $region49: #{tpu_custom_call.1} parent=1 // pred_fallthru
      _
    %v71 = vld [vmem:[#allocation2] sm:$0xff]
    %v72 = vld [vmem:[%s1] sm:$0xff]
    %v73 = vld [vmem:[%s2] sm:$0xff]
    %v74 = vld [vmem:[%s2 + $0x8] sm:$0xf]
    %v75 = vld [vmem:[%s3] sm:$0xf]
    %vm76 = vcmask 31744
    %v78 = vsel %vm76, %v72, 0
    %vm80 = vcmask 1043456
    %v82 = vsel %vm80, %v75, 0
    %84 = vmatprep.subr.mxu0 0.0
    %85 = vmatpush1.msra.mxu0 %v82
    %86 = vmatprep.subr.mxu0 0.0
    %87 = vmatpush1.msra.mxu0 0.0
    %88 = vmatprep.subr.mxu0 0.0
    %89 = vmatpush1.msra.mxu0 0.0
    %90 = vmatprep.subr.mxu0 0.0
    %91 = vmatpush1.msra.mxu0 0.0
    %92 = vmatprep.subr.mxu0 0.0
    %93 = vmatpush1.msra.mxu0 0.0
    %94 = vmatprep.subr.mxu0 0.0
    %95 = vmatpush1.msra.mxu0 0.0
    %96 = vmatprep.subr.mxu0 0.0
    %97 = vmatpush1.msra.mxu0 0.0
    %98 = vmatprep.subr.mxu0 0.0
    %99 = vmatpush1.msra.mxu0 0.0
    %100 = vmatprep.subr.mxu0 0.0
    %101 = vmatpush1.msra.mxu0 0.0
    %102 = vmatprep.subr.mxu0 0.0
    %103 = vmatpush1.msra.mxu0 0.0
    %104 = vmatprep.subr.mxu0 0.0
    %105 = vmatpush1.msra.mxu0 0.0
    %106 = vmatprep.subr.mxu0 0.0
    %107 = vmatpush1.msra.mxu0 0.0
    %108 = vmatprep.subr.mxu0 0.0
    %109 = vmatpush1.msra.mxu0 0.0
    %110 = vmatprep.subr.mxu0 0.0
    %111 = vmatpush1.msra.mxu0 0.0
    %112 = vmatprep.subr.mxu0 0.0
    %113 = vmatpush1.msra.mxu0 0.0
    %114 = vmatprep.subr.mxu0 0.0
    %115 = vmatpush1.msra.mxu0 0.0
    %116 = vmatprep.subr.mxu0 0.0
    %117 = vmatpush1.msra.mxu0 0.0
    %118 = vmatprep.subr.mxu0 0.0
    %119 = vmatpush1.msra.mxu0 0.0
    %120 = vmatprep.subr.mxu0 0.0
    %121 = vmatpush1.msra.mxu0 0.0
    %122 = vmatprep.subr.mxu0 0.0
    %123 = vmatpush1.msra.mxu0 0.0
    %124 = vmatprep.subr.mxu0 0.0
    %125 = vmatpush1.msra.mxu0 0.0
    %126 = vmatprep.subr.mxu0 0.0
    %127 = vmatpush1.msra.mxu0 0.0
    %128 = vmatprep.subr.mxu0 0.0
    %129 = vmatpush1.msra.mxu0 0.0
    %130 = vmatprep.subr.mxu0 0.0
    %131 = vmatpush1.msra.mxu0 0.0
    %132 = vmatprep.subr.mxu0 0.0
    %133 = vmatpush1.msra.mxu0 0.0
    %134 = vmatprep.subr.mxu0 0.0
    %135 = vmatpush1.msra.mxu0 0.0
    %136 = vmatprep.subr.mxu0 0.0
    %137 = vmatpush1.msra.mxu0 0.0
    %138 = vmatprep.subr.mxu0 0.0
    %139 = vmatpush1.msra.mxu0 0.0
    %140 = vmatprep.subr.mxu0 0.0
    %141 = vmatpush1.msra.mxu0 0.0
    %142 = vmatprep.subr.mxu0 0.0
    %143 = vmatpush1.msra.mxu0 0.0
    %144 = vmatprep.subr.mxu0 0.0
    %145 = vmatpush1.msra.mxu0 0.0
    %146 = vmatprep.subr.mxu0 0.0
    %147 = vmatpush1.msra.mxu0 0.0
    %148 = vmatprep.mubr.f32.mxu0 0.0
    %149 = vmatmul.mubr.f32.gmra.mrb[0].mxu0 %v78
    %v150 = vpop.f32.mrb[0].mxu0
    %v151 = vadd.f32 0.0, %v150
    %v152 = vpop.f32.mrb[0].mxu0
    %153 = vdwg.mxu0
    %vm154 = vcmask 97280
    %v156 = vsel %vm154, %v71, 0
    %v159 = vsel %vm80, %v74, 0
    %161 = vmatprep.subr.mxu0 0.0
    %162 = vmatpush1.msra.mxu0 %v73
    %163 = vmatprep.subr.mxu0 0.0
    %164 = vmatpush1.msra.mxu0 %v159
    %165 = vmatprep.subr.mxu0 0.0
    %166 = vmatpush1.msra.mxu0 0.0
    %167 = vmatprep.subr.mxu0 0.0
    %168 = vmatpush1.msra.mxu0 0.0
    %169 = vmatprep.subr.mxu0 0.0
    %170 = vmatpush1.msra.mxu0 0.0
    %171 = vmatprep.subr.mxu0 0.0
    %172 = vmatpush1.msra.mxu0 0.0
    %173 = vmatprep.subr.mxu0 0.0
    %174 = vmatpush1.msra.mxu0 0.0
    %175 = vmatprep.subr.mxu0 0.0
    %176 = vmatpush1.msra.mxu0 0.0
    %177 = vmatprep.subr.mxu0 0.0
    %178 = vmatpush1.msra.mxu0 0.0
    %179 = vmatprep.subr.mxu0 0.0
    %180 = vmatpush1.msra.mxu0 0.0
    %181 = vmatprep.subr.mxu0 0.0
    %182 = vmatpush1.msra.mxu0 0.0
    %183 = vmatprep.subr.mxu0 0.0
    %184 = vmatpush1.msra.mxu0 0.0
    %185 = vmatprep.subr.mxu0 0.0
    %186 = vmatpush1.msra.mxu0 0.0
    %187 = vmatprep.subr.mxu0 0.0
    %188 = vmatpush1.msra.mxu0 0.0
    %189 = vmatprep.subr.mxu0 0.0
    %190 = vmatpush1.msra.mxu0 0.0
    %191 = vmatprep.subr.mxu0 0.0
    %192 = vmatpush1.msra.mxu0 0.0
    %193 = vmatprep.subr.mxu0 0.0
    %194 = vmatpush1.msra.mxu0 0.0
    %195 = vmatprep.subr.mxu0 0.0
    %196 = vmatpush1.msra.mxu0 0.0
    %197 = vmatprep.subr.mxu0 0.0
    %198 = vmatpush1.msra.mxu0 0.0
    %199 = vmatprep.subr.mxu0 0.0
    %200 = vmatpush1.msra.mxu0 0.0
    %201 = vmatprep.subr.mxu0 0.0
    %202 = vmatpush1.msra.mxu0 0.0
    %203 = vmatprep.subr.mxu0 0.0
    %204 = vmatpush1.msra.mxu0 0.0
    %205 = vmatprep.subr.mxu0 0.0
    %206 = vmatpush1.msra.mxu0 0.0
    %207 = vmatprep.subr.mxu0 0.0
    %208 = vmatpush1.msra.mxu0 0.0
    %209 = vmatprep.subr.mxu0 0.0
    %210 = vmatpush1.msra.mxu0 0.0
    %211 = vmatprep.subr.mxu0 0.0
    %212 = vmatpush1.msra.mxu0 0.0
    %213 = vmatprep.subr.mxu0 0.0
    %214 = vmatpush1.msra.mxu0 0.0
    %215 = vmatprep.subr.mxu0 0.0
    %216 = vmatpush1.msra.mxu0 0.0
    %217 = vmatprep.subr.mxu0 0.0
    %218 = vmatpush1.msra.mxu0 0.0
    %219 = vmatprep.subr.mxu0 0.0
    %220 = vmatpush1.msra.mxu0 0.0
    %221 = vmatprep.subr.mxu0 0.0
    %222 = vmatpush1.msra.mxu0 0.0
    %223 = vmatprep.subr.mxu0 0.0
    %224 = vmatpush1.msra.mxu0 0.0
    %225 = vmatprep.mubr.f32.mxu0 0.0
    %226 = vmatmul.mubr.f32.gmra.mrb[0].mxu0 %v156
    %v227 = vpop.f32.mrb[0].mxu0
    %v228 = vadd.f32 %v151, %v227
    %v229 = vpop.f32.mrb[0].mxu0
    %230 = vdwg.mxu0
    %v231 = vld [vmem:[%s4] sm:$0x1]
    %v233 = vlaneseq
    %v234 = vshrl.u32 %v233, 7
    %v235 = vsub.s32 0, %v234
    %v236 = vrot.slane %v231, %v235
    %v238 = vadd.f32 %v228, %v236
    %v239 = vmul.f32 %v238, 0.01
    %v240 = vmax.f32 %v238, %v239
    %v241 = vld [vmem:[#allocation4] sm:$0xff]
    %v242 = vld [vmem:[#allocation4 + $0x8] sm:$0xff]
    %v243 = vld [vmem:[#allocation4 + $0x10] sm:$0xff]
    %v244 = vld [vmem:[#allocation4 + $0x18] sm:$0xff]
    %v245 = vld [vmem:[#allocation4 + $0x20] sm:$0xff]
    %v246 = vld [vmem:[#allocation4 + $0x28] sm:$0xff]
    %v247 = vld [vmem:[#allocation4 + $0x30] sm:$0xff]
    %v248 = vld [vmem:[#allocation4 + $0x38] sm:$0xff]
    %v249 = vld [vmem:[#allocation4 + $0x40] sm:$0xff]
    %v250 = vld [vmem:[#allocation4 + $0x48] sm:$0xff]
    %v251 = vld [vmem:[#allocation4 + $0x50] sm:$0xff]
    %v252 = vld [vmem:[#allocation4 + $0x58] sm:$0xff]
    %v253 = vld [vmem:[#allocation4 + $0x60] sm:$0xff]
    %v254 = vld [vmem:[#allocation4 + $0x68] sm:$0xff]
    %v255 = vld [vmem:[#allocation4 + $0x70] sm:$0xff]
    %v256 = vld [vmem:[#allocation4 + $0x78] sm:$0xff]
    %v257 = vld [vmem:[%s6] sm:$0x1]
    %v259 = vlaneseq
    %v260 = vshrl.u32 %v259, 7
    %v261 = vsub.s32 0, %v260
    %v262 = vrot.slane %v257, %v261
    %264 = vmatprep.subr.mxu0 0.0
    %265 = vmatpush1.msra.mxu0 %v241
    %266 = vmatprep.subr.mxu0 0.0
    %267 = vmatpush1.msra.mxu0 %v242
    %268 = vmatprep.subr.mxu0 0.0
    %269 = vmatpush1.msra.mxu0 %v243
    %270 = vmatprep.subr.mxu0 0.0
    %271 = vmatpush1.msra.mxu0 %v244
    %272 = vmatprep.subr.mxu0 0.0
    %273 = vmatpush1.msra.mxu0 %v245
    %274 = vmatprep.subr.mxu0 0.0
    %275 = vmatpush1.msra.mxu0 %v246
    %276 = vmatprep.subr.mxu0 0.0
    %277 = vmatpush1.msra.mxu0 %v247
    %278 = vmatprep.subr.mxu0 0.0
    %279 = vmatpush1.msra.mxu0 %v248
    %280 = vmatprep.subr.mxu0 0.0
    %281 = vmatpush1.msra.mxu0 %v249
    %282 = vmatprep.subr.mxu0 0.0
    %283 = vmatpush1.msra.mxu0 %v250
    %284 = vmatprep.subr.mxu0 0.0
    %285 = vmatpush1.msra.mxu0 %v251
    %286 = vmatprep.subr.mxu0 0.0
    %287 = vmatpush1.msra.mxu0 %v252
    %288 = vmatprep.subr.mxu0 0.0
    %289 = vmatpush1.msra.mxu0 %v253
    %290 = vmatprep.subr.mxu0 0.0
    %291 = vmatpush1.msra.mxu0 %v254
    %292 = vmatprep.subr.mxu0 0.0
    %293 = vmatpush1.msra.mxu0 %v255
    %294 = vmatprep.subr.mxu0 0.0
    %295 = vmatpush1.msra.mxu0 %v256
    %296 = vmatprep.subr.mxu0 0.0
    %297 = vmatpush1.msra.mxu0 0.0
    %298 = vmatprep.subr.mxu0 0.0
    %299 = vmatpush1.msra.mxu0 0.0
    %300 = vmatprep.subr.mxu0 0.0
    %301 = vmatpush1.msra.mxu0 0.0
    %302 = vmatprep.subr.mxu0 0.0
    %303 = vmatpush1.msra.mxu0 0.0
    %304 = vmatprep.subr.mxu0 0.0
    %305 = vmatpush1.msra.mxu0 0.0
    %306 = vmatprep.subr.mxu0 0.0
    %307 = vmatpush1.msra.mxu0 0.0
    %308 = vmatprep.subr.mxu0 0.0
    %309 = vmatpush1.msra.mxu0 0.0
    %310 = vmatprep.subr.mxu0 0.0
    %311 = vmatpush1.msra.mxu0 0.0
    %312 = vmatprep.subr.mxu0 0.0
    %313 = vmatpush1.msra.mxu0 0.0
    %314 = vmatprep.subr.mxu0 0.0
    %315 = vmatpush1.msra.mxu0 0.0
    %316 = vmatprep.subr.mxu0 0.0
    %317 = vmatpush1.msra.mxu0 0.0
    %318 = vmatprep.subr.mxu0 0.0
    %319 = vmatpush1.msra.mxu0 0.0
    %320 = vmatprep.subr.mxu0 0.0
    %321 = vmatpush1.msra.mxu0 0.0
    %322 = vmatprep.subr.mxu0 0.0
    %323 = vmatpush1.msra.mxu0 0.0
    %324 = vmatprep.subr.mxu0 0.0
    %325 = vmatpush1.msra.mxu0 0.0
    %326 = vmatprep.subr.mxu0 0.0
    %327 = vmatpush1.msra.mxu0 0.0
    %328 = vmatprep.mubr.f32.mxu0 0.0
    %329 = vmatmul.mubr.f32.gmra.mrb[0].mxu0 %v240
    %v330 = vpop.f32.mrb[0].mxu0
    %v331 = vadd.f32 %v262, %v330
    %v332 = vpop.f32.mrb[0].mxu0
    %333 = vdwg.mxu0
    %v334 = vmul.f32 %v331, 0.01
    %v335 = vmax.f32 %v331, %v334
    %v336 = vld [vmem:[#allocation6] sm:$0xff]
    %v337 = vld [vmem:[#allocation6 + $0x8] sm:$0xff]
    %v338 = vld [vmem:[#allocation6 + $0x10] sm:$0xff]
    %v339 = vld [vmem:[#allocation6 + $0x18] sm:$0xff]
    %v340 = vld [vmem:[#allocation6 + $0x20] sm:$0xff]
    %v341 = vld [vmem:[#allocation6 + $0x28] sm:$0xff]
    %v342 = vld [vmem:[#allocation6 + $0x30] sm:$0xff]
    %v343 = vld [vmem:[#allocation6 + $0x38] sm:$0xff]
    %v344 = vld [vmem:[#allocation6 + $0x40] sm:$0xff]
    %v345 = vld [vmem:[#allocation6 + $0x48] sm:$0xff]
    %v346 = vld [vmem:[#allocation6 + $0x50] sm:$0xff]
    %v347 = vld [vmem:[#allocation6 + $0x58] sm:$0xff]
    %v348 = vld [vmem:[#allocation6 + $0x60] sm:$0xff]
    %v349 = vld [vmem:[#allocation6 + $0x68] sm:$0xff]
    %v350 = vld [vmem:[#allocation6 + $0x70] sm:$0xff]
    %v351 = vld [vmem:[#allocation6 + $0x78] sm:$0xff]
    %v352 = vld [vmem:[%s8] sm:$0x1]
    %v354 = vlaneseq
    %v355 = vshrl.u32 %v354, 7
    %v356 = vsub.s32 0, %v355
    %v357 = vrot.slane %v352, %v356
    %359 = vmatprep.subr.mxu0 0.0
    %360 = vmatpush1.msra.mxu0 %v336
    %361 = vmatprep.subr.mxu0 0.0
    %362 = vmatpush1.msra.mxu0 %v337
    %363 = vmatprep.subr.mxu0 0.0
    %364 = vmatpush1.msra.mxu0 %v338
    %365 = vmatprep.subr.mxu0 0.0
    %366 = vmatpush1.msra.mxu0 %v339
    %367 = vmatprep.subr.mxu0 0.0
    %368 = vmatpush1.msra.mxu0 %v340
    %369 = vmatprep.subr.mxu0 0.0
    %370 = vmatpush1.msra.mxu0 %v341
    %371 = vmatprep.subr.mxu0 0.0
    %372 = vmatpush1.msra.mxu0 %v342
    %373 = vmatprep.subr.mxu0 0.0
    %374 = vmatpush1.msra.mxu0 %v343
    %375 = vmatprep.subr.mxu0 0.0
    %376 = vmatpush1.msra.mxu0 %v344
    %377 = vmatprep.subr.mxu0 0.0
    %378 = vmatpush1.msra.mxu0 %v345
    %379 = vmatprep.subr.mxu0 0.0
    %380 = vmatpush1.msra.mxu0 %v346
    %381 = vmatprep.subr.mxu0 0.0
    %382 = vmatpush1.msra.mxu0 %v347
    %383 = vmatprep.subr.mxu0 0.0
    %384 = vmatpush1.msra.mxu0 %v348
    %385 = vmatprep.subr.mxu0 0.0
    %386 = vmatpush1.msra.mxu0 %v349
    %387 = vmatprep.subr.mxu0 0.0
    %388 = vmatpush1.msra.mxu0 %v350
    %389 = vmatprep.subr.mxu0 0.0
    %390 = vmatpush1.msra.mxu0 %v351
    %391 = vmatprep.subr.mxu0 0.0
    %392 = vmatpush1.msra.mxu0 0.0
    %393 = vmatprep.subr.mxu0 0.0
    %394 = vmatpush1.msra.mxu0 0.0
    %395 = vmatprep.subr.mxu0 0.0
    %396 = vmatpush1.msra.mxu0 0.0
    %397 = vmatprep.subr.mxu0 0.0
    %398 = vmatpush1.msra.mxu0 0.0
    %399 = vmatprep.subr.mxu0 0.0
    %400 = vmatpush1.msra.mxu0 0.0
    %401 = vmatprep.subr.mxu0 0.0
    %402 = vmatpush1.msra.mxu0 0.0
    %403 = vmatprep.subr.mxu0 0.0
    %404 = vmatpush1.msra.mxu0 0.0
    %405 = vmatprep.subr.mxu0 0.0
    %406 = vmatpush1.msra.mxu0 0.0
    %407 = vmatprep.subr.mxu0 0.0
    %408 = vmatpush1.msra.mxu0 0.0
    %409 = vmatprep.subr.mxu0 0.0
    %410 = vmatpush1.msra.mxu0 0.0
    %411 = vmatprep.subr.mxu0 0.0
    %412 = vmatpush1.msra.mxu0 0.0
    %413 = vmatprep.subr.mxu0 0.0
    %414 = vmatpush1.msra.mxu0 0.0
    %415 = vmatprep.subr.mxu0 0.0
    %416 = vmatpush1.msra.mxu0 0.0
    %417 = vmatprep.subr.mxu0 0.0
    %418 = vmatpush1.msra.mxu0 0.0
    %419 = vmatprep.subr.mxu0 0.0
    %420 = vmatpush1.msra.mxu0 0.0
    %421 = vmatprep.subr.mxu0 0.0
    %422 = vmatpush1.msra.mxu0 0.0
    %423 = vmatprep.mubr.f32.mxu0 0.0
    %424 = vmatmul.mubr.f32.gmra.mrb[0].mxu0 %v335
    %v425 = vpop.f32.mrb[0].mxu0
    %v426 = vadd.f32 %v357, %v425
    %v427 = vpop.f32.mrb[0].mxu0
    %428 = vdwg.mxu0
    %429 = vst.msk [vmem:[%s9] sm:$0xff] %vm76, %v426
    // Predicated region
    $region50: #{tpu_custom_call.1} parent=1 // pred_check
      _
    $region51: #{tpu_custom_call.1} parent=1 // pred_check_branch
      %431 = sbr.rel (0) target = $region53
    $region52: #{tpu_custom_call.1} parent=1 // pred_region
      _
    $region53: #{tpu_custom_call.1} parent=1 // pred_fallthru
      _
    // Predicated region
    $region54: #{tpu_custom_call.1} parent=1 // pred_check
      _
    $region55: #{tpu_custom_call.1} parent=1 // pred_check_branch
      %433 = sbr.rel (0) target = $region57
    $region56: #{tpu_custom_call.1} parent=1 // pred_region
      _
    $region57: #{tpu_custom_call.1} parent=1 // pred_fallthru
      _
    %434 = vsyncpa [#allocation3], 1
    %435 = vsyncpa [#allocation5], 1

</llo_original>
